<compile_context>
chip_gen: v7x
topology: tpu7x:2x2x1
jax: 0.10.0
libtpu: 0.0.40
codegen_flags: <defaults>
</compile_context>

<pallas_src>
import functools

import jax
import jax.numpy as jnp
from jax.experimental import pallas as pl
from jax.experimental.pallas import tpu as pltpu


# ------------------------------ kernel bodies ------------------------------ #
def _apply_shift_act(acc, shift_ref, alpha_ref, activation):
    """Bias/BN shift + activation, all in f32 (VPU / EUP)."""
    acc = acc + shift_ref[...]
    if activation in ("prelu", "leakyrelu"):
        a = alpha_ref[0, 0]                       # runtime SMEM scalar slope
        acc = jnp.where(acc >= 0.0, acc, a * acc)
    elif activation == "tanh":
        acc = jnp.tanh(acc)
    return acc


def _conv_kernel_pertap(x_ref, w_ref, shift_ref, alpha_ref, o_ref, *,
                        k, wp, activation):
    """Per-tap path: k*k shifted matmuls, f32 accumulation.

    x_ref     : (C_in, Lx)          flattened padded image (compute dtype)
    w_ref     : (k*k, C_out, C_in)  per-tap weights, BN scale folded
    shift_ref : (C_out, 1)          f32 bias/BN shift
    alpha_ref : (1, 1)              f32 slope (SMEM scalar)
    o_ref     : (C_out, Lo)         f32, Lo = Ho*Wp (lane-dense, channel-major)
    """
    c_out, lo = o_ref.shape
    acc = jnp.zeros((c_out, lo), jnp.float32)
    for dh in range(k):
        for dw in range(k):
            off = dh * wp + dw                    # tap = lane-shifted slice
            acc = acc + jnp.dot(w_ref[dh * k + dw], x_ref[:, off:off + lo],
                                preferred_element_type=jnp.float32)
    o_ref[...] = _apply_shift_act(acc, shift_ref, alpha_ref,
                                  activation).astype(o_ref.dtype)


def _conv_kernel_stacked(x_ref, w_ref, shift_ref, alpha_ref, o_ref, xk_ref, *,
                         k, wp, c_in, c_in_p, activation):
    """Stacked path: build (k*k*C_in_p, Lo) operand in VMEM, ONE matmul.

    w_ref  : (C_out, k*k*C_in_p)  tap-major columns, zero-padded channels
    xk_ref : (k*k*C_in_p, Lo)     VMEM scratch (tap blocks at aligned rows)
    """
    c_out, lo = o_ref.shape
    if c_in_p != c_in:
        # Zero every step (scratch is uninitialized / core-local): pad rows
        # must be finite so that pad_row * zero_weight == 0.
        xk_ref[...] = jnp.zeros_like(xk_ref)
    for dh in range(k):
        for dw in range(k):
            off = dh * wp + dw
            tap = dh * k + dw
            # Tile-row-aligned static offset store of the tap slice.
            xk_ref[pl.ds(tap * c_in_p, c_in), :] = x_ref[:, off:off + lo]
    acc = jnp.dot(w_ref[...], xk_ref[...], preferred_element_type=jnp.float32)
    o_ref[...] = _apply_shift_act(acc, shift_ref, alpha_ref,
                                  activation).astype(o_ref.dtype)


# --------------------------------- wrapper --------------------------------- #
def conv_block_forward(x_nchw, weight, bias, bn_params=None, activation=None,
                       stride=1, prelu_a=0.25, compute_dtype=jnp.bfloat16):
    """Forward pass of ConvolutionalBlock.

    x_nchw : (N, C_in, H, W) f32
    weight : (C_out, C_in, k, k) f32
    bias   : (C_out,) f32
    bn_params : None or dict(gamma, beta, running_mean, running_var, eps)
    compute_dtype : matmul operand dtype (bf16 for v6e/v7x, f32 for v5e).
    """
    n, c_in, h, w = x_nchw.shape
    c_out, c_in_w, k, k2 = weight.shape
    assert k == k2 and c_in_w == c_in, "square kernels / matching channels only"
    pad = k // 2
    hp, wp = h + 2 * pad, w + 2 * pad
    ho1, wo1 = hp - k + 1, wp - k + 1            # stride-1 output dims
    lo = ho1 * wp                                # lane-dense output length
    lx = (hp + 1) * wp                           # +1 pad row keeps taps in-bounds
    kk = k * k

    act = None if activation is None else activation.lower()
    if act not in (None, "prelu", "leakyrelu", "tanh"):
        raise ValueError(f"Activation should be 'leakyrelu', 'prelu' or "
                         f"'tanh' but is '{activation}'.")

    # ---- fold bias + eval-mode BN into per-channel scale/shift (f32) -------
    bias = bias.astype(jnp.float32)
    if bn_params is not None:
        gamma = bn_params["gamma"].astype(jnp.float32)
        beta = bn_params["beta"].astype(jnp.float32)
        mean = bn_params["running_mean"].astype(jnp.float32)
        var = bn_params["running_var"].astype(jnp.float32)
        scale = gamma * jax.lax.rsqrt(var + bn_params["eps"])
        shift = beta + (bias - mean) * scale
    else:
        scale = jnp.ones((c_out,), jnp.float32)
        shift = bias

    # Fold scale into weights (exact), per-tap layout (k*k, C_out, C_in).
    w_taps = weight.astype(jnp.float32).transpose(2, 3, 0, 1)
    w_taps = w_taps.reshape(kk, c_out, c_in) * scale[None, :, None]
    shift = shift.reshape(c_out, 1)
    alpha = jnp.asarray(prelu_a if act == "prelu" else 0.2,
                        jnp.float32).reshape(1, 1)

    # ---- choose per-tap vs single stacked matmul ----------------------------
    itemsize = jnp.dtype(compute_dtype).itemsize
    sub = 8 * max(1, 4 // itemsize)              # sublane tile rows (packing)
    c_in_p = ((c_in + sub - 1) // sub) * sub     # aligned per-tap row block
    stacked = (kk * c_in_p <= 256                # one MXU K-pass
               and kk * c_in_p * lo * itemsize <= (4 << 20))

    if stacked:
        # (C_out, k*k*C_in_p): column index tap*C_in_p + c, zero pad channels.
        w_st = jnp.pad(w_taps, ((0, 0), (0, 0), (0, c_in_p - c_in)))
        w_st = w_st.transpose(1, 0, 2).reshape(c_out, kk * c_in_p)
        w_arg = w_st.astype(compute_dtype)
        w_spec = pl.BlockSpec((c_out, kk * c_in_p), lambda i: (0, 0))
        scratch = [pltpu.VMEM((kk * c_in_p, lo), compute_dtype)]
        kernel = functools.partial(_conv_kernel_stacked, k=k, wp=wp,
                                   c_in=c_in, c_in_p=c_in_p, activation=act)
    else:
        w_arg = w_taps.astype(compute_dtype)
        w_spec = pl.BlockSpec((kk, c_out, c_in), lambda i: (0, 0, 0))
        scratch = []
        kernel = functools.partial(_conv_kernel_pertap, k=k, wp=wp,
                                   activation=act)

    # ---- pad + flatten input: 1x data, no transpose, no k^2 expansion ------
    xp = jnp.pad(x_nchw.astype(compute_dtype),
                 ((0, 0), (0, 0), (pad, pad + 1), (pad, pad)))
    xf = xp.reshape(n, c_in, lx)

    out_flat = pl.pallas_call(
        kernel,
        out_shape=jax.ShapeDtypeStruct((n, c_out, lo), jnp.float32),
        grid_spec=pltpu.PrefetchScalarGridSpec(
            num_scalar_prefetch=0,
            grid=(n,),                                            # one image/step
            in_specs=[
                pl.BlockSpec((None, c_in, lx), lambda i: (i, 0, 0)),   # image
                w_spec,                                                 # weights
                pl.BlockSpec((c_out, 1), lambda i: (0, 0)),             # shift
                pl.BlockSpec(memory_space=pltpu.MemorySpace.SMEM),      # alpha
            ],
            out_specs=pl.BlockSpec((None, c_out, lo), lambda i: (i, 0, 0)),
            scratch_shapes=scratch,
        ),
        compiler_params=pltpu.CompilerParams(
            dimension_semantics=("parallel",),   # batch shards across TCs (v7x)
            vmem_limit_bytes=32 << 20,
        ),
    )(xf, w_arg, shift, alpha)

    # Already channel-major (NCHW): drop the Wp-Wo garbage columns.
    out = out_flat.reshape(n, c_out, ho1, wp)[:, :, :, :wo1]
    if stride > 1:
        out = out[:, :, ::stride, ::stride]      # exact (same-padding subsample)
    return out


# ---------------------------- reference (JAX) ------------------------------ #
def _reference(x, weight, bias, bn_params, activation, stride, prelu_a,
               compute_dtype=None):
    c_out = weight.shape[0]
    pad = weight.shape[-1] // 2
    if bn_params is not None:
        scale = bn_params["gamma"] / jnp.sqrt(bn_params["running_var"]
                                              + bn_params["eps"])
        shift = bn_params["beta"] + (bias - bn_params["running_mean"]) * scale
    else:
        scale = jnp.ones((c_out,), jnp.float32)
        shift = bias
    w_f = weight * scale[:, None, None, None]
    if compute_dtype is not None:   # mirror the kernel's operand quantization
        x = x.astype(compute_dtype).astype(jnp.float32)
        w_f = w_f.astype(compute_dtype).astype(jnp.float32)
    y = jax.lax.conv_general_dilated(
        x, w_f, window_strides=(stride, stride),
        padding=[(pad, pad), (pad, pad)],
        dimension_numbers=("NCHW", "OIHW", "NCHW"))
    y = y + shift[None, :, None, None]
    a = activation.lower() if activation else None
    if a == "prelu":
        y = jnp.where(y >= 0, y, prelu_a * y)
    elif a == "leakyrelu":
        y = jnp.where(y >= 0, y, 0.2 * y)
    elif a == "tanh":
        y = jnp.tanh(y)
    return y


# ---------------------------------- test ----------------------------------- #
def _run_case(name, key, *, n, c_in, c_out, hw, k, stride, batch_norm,
              activation, prelu_a=0.25, compute_dtype=jnp.bfloat16):
    ks = jax.random.split(key, 7)
    x = jax.random.normal(ks[0], (n, c_in, hw, hw), jnp.float32)
    weight = jax.random.normal(ks[1], (c_out, c_in, k, k), jnp.float32) * 0.1
    bias = jax.random.normal(ks[2], (c_out,), jnp.float32) * 0.1
    bn = None
    if batch_norm:
        bn = {
            "gamma": jax.random.normal(ks[3], (c_out,), jnp.float32) * 0.1 + 1.0,
            "beta": jax.random.normal(ks[4], (c_out,), jnp.float32) * 0.1,
            "running_mean": jax.random.normal(ks[5], (c_out,), jnp.float32) * 0.1,
            "running_var": jax.random.uniform(ks[6], (c_out,), jnp.float32,
                                              minval=0.5, maxval=1.5),
            "eps": 1e-5,
        }

    out = conv_block_forward(x, weight, bias, bn, activation, stride=stride,
                             prelu_a=prelu_a, compute_dtype=compute_dtype)
    out = jax.block_until_ready(out)
    ho = (hw + 2 * (k // 2) - k) // stride + 1
    assert out.shape == (n, c_out, ho, ho), (name, out.shape)

    # Tight check vs. a reference using the same bf16-rounded operands.
    ref_q = _reference(x, weight, bias, bn, activation, stride, prelu_a,
                       compute_dtype=compute_dtype)
    err_q = float(jnp.max(jnp.abs(out - ref_q)))
    assert jnp.allclose(out, ref_q, atol=5e-3, rtol=5e-3), (name, err_q)

    # Loose sanity check vs. the exact f32 reference (operand-quant error only).
    ref = _reference(x, weight, bias, bn, activation, stride, prelu_a)
    err = float(jnp.max(jnp.abs(out - ref)))
    assert jnp.allclose(out, ref, atol=1e-1, rtol=1e-1), (name, err)


if __name__ == "__main__":
    root = jax.random.PRNGKey(0)
    k1, k2, k3 = jax.random.split(root, 3)

    # ConvolutionalBlock(4, 8, 3, stride=1, batch_norm=True, activation='prelu')
    _run_case("bn_prelu_stacked", k1, n=2, c_in=4, c_out=8, hw=16, k=3,
              stride=1, batch_norm=True, activation="prelu", prelu_a=0.25)

    # Discriminator-style block: stride 2, LeakyReLU(0.2), no BN (per-tap path).
    _run_case("stride2_leakyrelu", k2, n=2, c_in=32, c_out=32, hw=16, k=3,
              stride=2, batch_norm=False, activation="leakyrelu")

    # Generator tail-style block: large 9x9 kernel, Tanh, no BN.
    _run_case("k9_tanh", k3, n=1, c_in=4, c_out=3, hw=16, k=9,
              stride=1, batch_norm=False, activation="tanh")

    print("KERNEL_OK")
</pallas_src>

<mosaic_0001>
module attributes {stable_mosaic.version = 11 : i64} {
  func.func @_conv_kernel_stacked(%arg0: i32, %arg1: memref<1x4x342xbf16, #tpu.memory_space<vmem>>, %arg2: memref<8x144xbf16, #tpu.memory_space<vmem>>, %arg3: memref<8x1xf32, #tpu.memory_space<vmem>>, %arg4: memref<1x1xf32, #tpu.memory_space<smem>>, %arg5: memref<1x8x288xf32, #tpu.memory_space<vmem>>, %arg6: memref<144x288xbf16, #tpu.memory_space<vmem>>) attributes {dimension_semantics = [#tpu.dimension_semantics<parallel>], iteration_bounds = array<i64: 2>, scalar_prefetch = 0 : i64, scratch_operands = 1 : i64, tpu.core_type = #tpu.core_type<tc>, window_params = [{transform_indices = @transform_0, window_bounds = array<i64: 1, 4, 342>}, {pipeline_mode = #tpu.pipeline_mode<synchronous>, transform_indices = @transform_1, window_bounds = array<i64: 8, 144>}, {pipeline_mode = #tpu.pipeline_mode<synchronous>, transform_indices = @transform_2, window_bounds = array<i64: 8, 1>}, {transform_indices = @transform_3, window_bounds = array<i64: 1, 1>}, {transform_indices = @transform_4, window_bounds = array<i64: 1, 8, 288>}]} {
    %cst = arith.constant 0.000000e+00 : bf16
    %0 = vector.broadcast %cst : bf16 to vector<144x288xbf16>
    %c0 = arith.constant 0 : index
    %c0_0 = arith.constant 0 : index
    %1 = vector.load %arg6[%c0, %c0_0] : memref<144x288xbf16, #tpu.memory_space<vmem>>, vector<144x288xbf16>
    tpu.vector_store %arg6[%c0, %c0_0], %0 {strides = array<i32>} : memref<144x288xbf16, #tpu.memory_space<vmem>>, vector<144x288xbf16>,
    %c0_1 = arith.constant 0 : index
    %c0_2 = arith.constant 0 : index
    %c0_3 = arith.constant 0 : index
    %2 = vector.load %arg1[%c0_1, %c0_2, %c0_3] : memref<1x4x342xbf16, #tpu.memory_space<vmem>>, vector<1x4x288xbf16>
    %3 = vector.shape_cast %2 : vector<1x4x288xbf16> to vector<4x288xbf16>
    %c0_4 = arith.constant 0 : index
    %c0_5 = arith.constant 0 : index
    %4 = vector.load %arg6[%c0_4, %c0_5] : memref<144x288xbf16, #tpu.memory_space<vmem>>, vector<4x288xbf16>
    tpu.vector_store %arg6[%c0_4, %c0_5], %3 {strides = array<i32>} : memref<144x288xbf16, #tpu.memory_space<vmem>>, vector<4x288xbf16>,
    %c0_6 = arith.constant 0 : index
    %c0_7 = arith.constant 0 : index
    %c1 = arith.constant 1 : index
    %5 = vector.load %arg1[%c0_6, %c0_7, %c1] : memref<1x4x342xbf16, #tpu.memory_space<vmem>>, vector<1x4x288xbf16>
    %6 = vector.shape_cast %5 : vector<1x4x288xbf16> to vector<4x288xbf16>
    %c16 = arith.constant 16 : index
    %c0_8 = arith.constant 0 : index
    %7 = vector.load %arg6[%c16, %c0_8] : memref<144x288xbf16, #tpu.memory_space<vmem>>, vector<4x288xbf16>
    tpu.vector_store %arg6[%c16, %c0_8], %6 {strides = array<i32>} : memref<144x288xbf16, #tpu.memory_space<vmem>>, vector<4x288xbf16>,
    %c0_9 = arith.constant 0 : index
    %c0_10 = arith.constant 0 : index
    %c2 = arith.constant 2 : index
    %8 = vector.load %arg1[%c0_9, %c0_10, %c2] : memref<1x4x342xbf16, #tpu.memory_space<vmem>>, vector<1x4x288xbf16>
    %9 = vector.shape_cast %8 : vector<1x4x288xbf16> to vector<4x288xbf16>
    %c32 = arith.constant 32 : index
    %c0_11 = arith.constant 0 : index
    %10 = vector.load %arg6[%c32, %c0_11] : memref<144x288xbf16, #tpu.memory_space<vmem>>, vector<4x288xbf16>
    tpu.vector_store %arg6[%c32, %c0_11], %9 {strides = array<i32>} : memref<144x288xbf16, #tpu.memory_space<vmem>>, vector<4x288xbf16>,
    %c0_12 = arith.constant 0 : index
    %c0_13 = arith.constant 0 : index
    %c18 = arith.constant 18 : index
    %11 = vector.load %arg1[%c0_12, %c0_13, %c18] : memref<1x4x342xbf16, #tpu.memory_space<vmem>>, vector<1x4x288xbf16>
    %12 = vector.shape_cast %11 : vector<1x4x288xbf16> to vector<4x288xbf16>
    %c48 = arith.constant 48 : index
    %c0_14 = arith.constant 0 : index
    %13 = vector.load %arg6[%c48, %c0_14] : memref<144x288xbf16, #tpu.memory_space<vmem>>, vector<4x288xbf16>
    tpu.vector_store %arg6[%c48, %c0_14], %12 {strides = array<i32>} : memref<144x288xbf16, #tpu.memory_space<vmem>>, vector<4x288xbf16>,
    %c0_15 = arith.constant 0 : index
    %c0_16 = arith.constant 0 : index
    %c19 = arith.constant 19 : index
    %14 = vector.load %arg1[%c0_15, %c0_16, %c19] : memref<1x4x342xbf16, #tpu.memory_space<vmem>>, vector<1x4x288xbf16>
    %15 = vector.shape_cast %14 : vector<1x4x288xbf16> to vector<4x288xbf16>
    %c64 = arith.constant 64 : index
    %c0_17 = arith.constant 0 : index
    %16 = vector.load %arg6[%c64, %c0_17] : memref<144x288xbf16, #tpu.memory_space<vmem>>, vector<4x288xbf16>
    tpu.vector_store %arg6[%c64, %c0_17], %15 {strides = array<i32>} : memref<144x288xbf16, #tpu.memory_space<vmem>>, vector<4x288xbf16>,
    %c0_18 = arith.constant 0 : index
    %c0_19 = arith.constant 0 : index
    %c20 = arith.constant 20 : index
    %17 = vector.load %arg1[%c0_18, %c0_19, %c20] : memref<1x4x342xbf16, #tpu.memory_space<vmem>>, vector<1x4x288xbf16>
    %18 = vector.shape_cast %17 : vector<1x4x288xbf16> to vector<4x288xbf16>
    %c80 = arith.constant 80 : index
    %c0_20 = arith.constant 0 : index
    %19 = vector.load %arg6[%c80, %c0_20] : memref<144x288xbf16, #tpu.memory_space<vmem>>, vector<4x288xbf16>
    tpu.vector_store %arg6[%c80, %c0_20], %18 {strides = array<i32>} : memref<144x288xbf16, #tpu.memory_space<vmem>>, vector<4x288xbf16>,
    %c0_21 = arith.constant 0 : index
    %c0_22 = arith.constant 0 : index
    %c36 = arith.constant 36 : index
    %20 = vector.load %arg1[%c0_21, %c0_22, %c36] : memref<1x4x342xbf16, #tpu.memory_space<vmem>>, vector<1x4x288xbf16>
    %21 = vector.shape_cast %20 : vector<1x4x288xbf16> to vector<4x288xbf16>
    %c96 = arith.constant 96 : index
    %c0_23 = arith.constant 0 : index
    %22 = vector.load %arg6[%c96, %c0_23] : memref<144x288xbf16, #tpu.memory_space<vmem>>, vector<4x288xbf16>
    tpu.vector_store %arg6[%c96, %c0_23], %21 {strides = array<i32>} : memref<144x288xbf16, #tpu.memory_space<vmem>>, vector<4x288xbf16>,
    %c0_24 = arith.constant 0 : index
    %c0_25 = arith.constant 0 : index
    %c37 = arith.constant 37 : index
    %23 = vector.load %arg1[%c0_24, %c0_25, %c37] : memref<1x4x342xbf16, #tpu.memory_space<vmem>>, vector<1x4x288xbf16>
    %24 = vector.shape_cast %23 : vector<1x4x288xbf16> to vector<4x288xbf16>
    %c112 = arith.constant 112 : index
    %c0_26 = arith.constant 0 : index
    %25 = vector.load %arg6[%c112, %c0_26] : memref<144x288xbf16, #tpu.memory_space<vmem>>, vector<4x288xbf16>
    tpu.vector_store %arg6[%c112, %c0_26], %24 {strides = array<i32>} : memref<144x288xbf16, #tpu.memory_space<vmem>>, vector<4x288xbf16>,
    %c0_27 = arith.constant 0 : index
    %c0_28 = arith.constant 0 : index
    %c38 = arith.constant 38 : index
    %26 = vector.load %arg1[%c0_27, %c0_28, %c38] : memref<1x4x342xbf16, #tpu.memory_space<vmem>>, vector<1x4x288xbf16>
    %27 = vector.shape_cast %26 : vector<1x4x288xbf16> to vector<4x288xbf16>
    %c128 = arith.constant 128 : index
    %c0_29 = arith.constant 0 : index
    %28 = vector.load %arg6[%c128, %c0_29] : memref<144x288xbf16, #tpu.memory_space<vmem>>, vector<4x288xbf16>
    tpu.vector_store %arg6[%c128, %c0_29], %27 {strides = array<i32>} : memref<144x288xbf16, #tpu.memory_space<vmem>>, vector<4x288xbf16>,
    %c0_30 = arith.constant 0 : index
    %c0_31 = arith.constant 0 : index
    %29 = vector.load %arg2[%c0_30, %c0_31] : memref<8x144xbf16, #tpu.memory_space<vmem>>, vector<8x144xbf16>
    %c0_32 = arith.constant 0 : index
    %c0_33 = arith.constant 0 : index
    %30 = vector.load %arg6[%c0_32, %c0_33] : memref<144x288xbf16, #tpu.memory_space<vmem>>, vector<144x288xbf16>
    %cst_34 = arith.constant dense<0.000000e+00> : vector<8x288xf32>
    %31 = tpu.matmul %29, %30, %cst_34 {dimension_numbers = #tpu.dot_dimension_numbers<[1], [0], [0], [1], [0, 0, 1, 1], [], []>} : vector<8x144xbf16>, vector<144x288xbf16>, vector<8x288xf32> -> vector<8x288xf32>
    %c0_35 = arith.constant 0 : index
    %c0_36 = arith.constant 0 : index
    %32 = vector.load %arg3[%c0_35, %c0_36] : memref<8x1xf32, #tpu.memory_space<vmem>>, vector<8x1xf32>
    %33 = vector.broadcast %32 : vector<8x1xf32> to vector<8x288xf32>
    %34 = arith.addf %31, %33 : vector<8x288xf32>
    %c0_37 = arith.constant 0 : index
    %c0_38 = arith.constant 0 : index
    %35 = memref.load %arg4[%c0_37, %c0_38] : memref<1x1xf32, #tpu.memory_space<smem>>
    %cst_39 = arith.constant 0.000000e+00 : f32
    %36 = vector.broadcast %cst_39 : f32 to vector<8x288xf32>
    %37 = arith.cmpf oge, %34, %36 : vector<8x288xf32>
    %38 = vector.broadcast %35 : f32 to vector<8x288xf32>
    %39 = arith.mulf %38, %34 : vector<8x288xf32>
    %40 = arith.select %37, %34, %39 : vector<8x288xi1>, vector<8x288xf32>
    %c0_40 = arith.constant 0 : index
    %c0_41 = arith.constant 0 : index
    %c0_42 = arith.constant 0 : index
    %41 = vector.load %arg5[%c0_40, %c0_41, %c0_42] : memref<1x8x288xf32, #tpu.memory_space<vmem>>, vector<1x8x288xf32>
    %42 = vector.shape_cast %41 : vector<1x8x288xf32> to vector<8x288xf32>
    %43 = vector.shape_cast %40 : vector<8x288xf32> to vector<1x8x288xf32>
    tpu.vector_store %arg5[%c0_40, %c0_41, %c0_42], %43 {strides = array<i32>} : memref<1x8x288xf32, #tpu.memory_space<vmem>>, vector<1x8x288xf32>,
    return
  }
  func.func @transform_0(%arg0: i32) -> (i32, i32, i32) {
    %c0_i32 = arith.constant 0 : i32
    %c0_i32_0 = arith.constant 0 : i32
    %c0_i32_1 = arith.constant 0 : i32
    return %arg0, %c0_i32, %c0_i32_0 : i32, i32, i32
  }
  func.func @transform_1(%arg0: i32) -> (i32, i32) {
    %c0_i32 = arith.constant 0 : i32
    %c0_i32_0 = arith.constant 0 : i32
    %c0_i32_1 = arith.constant 0 : i32
    return %c0_i32, %c0_i32_0 : i32, i32
  }
  func.func @transform_2(%arg0: i32) -> (i32, i32) {
    %c0_i32 = arith.constant 0 : i32
    %c0_i32_0 = arith.constant 0 : i32
    %c0_i32_1 = arith.constant 0 : i32
    return %c0_i32, %c0_i32_0 : i32, i32
  }
  func.func @transform_3(%arg0: i32) -> (i32, i32) {
    %c0_i32 = arith.constant 0 : i32
    %c0_i32_0 = arith.constant 0 : i32
    %c0_i32_1 = arith.constant 0 : i32
    return %c0_i32, %c0_i32_0 : i32, i32
  }
  func.func @transform_4(%arg0: i32) -> (i32, i32, i32) {
    %c0_i32 = arith.constant 0 : i32
    %c0_i32_0 = arith.constant 0 : i32
    %c0_i32_1 = arith.constant 0 : i32
    return %arg0, %c0_i32, %c0_i32_0 : i32, i32, i32
  }
}

</mosaic_0001>

<llo_original>
// kernel: tpu_custom_call.1
$region0: #{tpu_custom_call.1}
  #allocation0 [shape = 'u32[]', space=smem, size = 0x4, offset = 0x4, fixed_abs, tag = 'smem constant byte address 0x4 - core index']
  #allocation1 [shape = 'u32[144,128]{1,0:T(1,128)}', space=vmem, size = 0x12000, scoped, tag = 'internal scratch']
  #allocation2 [shape = 'bf16[144,288]{1,0:T(16,128)(2,1)}', space=vmem, size = 0x1b000, scoped, tag = 'scratch operand']
  #allocation3 [shape = 'f32[1,1]{1,0:T(1,128)S(6)}', space=smem, size = 0x200, scoped, tag = 'scoped memory for tpu_custom_call.1']
  %s0 = inlined_call_operand.vmem [shape: bf16[2,4,342], index: 0, kind: input, shape index: {}]
  %s1 = inlined_call_operand.hbm [shape: bf16[8,144], index: 1, kind: input, shape index: {}]
  %s2 = inlined_call_operand.vmem [shape: f32[8,1], index: 2, kind: input, shape index: {}]
  %s3 = inlined_call_operand.<no memory space> [shape: f32[1,1], index: 3, kind: input, shape index: {}]
  %s4 = inlined_call_operand.hbm [shape: f32[2,8,288], index: 4, kind: output, shape index: {}]
  %s5 = sld [smem:[#allocation0]]
  $region53: #{tpu_custom_call.1} parent=0
    _
  %s7 = ssub.s32 1, %s5
  %s8 = scalar_select 0, %s7, %s5
  %9 = sst [smem:[#allocation3]] %s3
  $region1: #{tpu_custom_call.1} parent=0
    #allocation4 [shape = 'u8[4096]{0}', space=vmem, size = 0x1000, scoped, tag = 'input window, operand 1, single buffered']
    #allocation5 [shape = 's32[2]{0}', space=sflag, size = 0x8, scoped, tag = 'scoped memory for tpu_custom_call.1']
    #allocation6 [shape = 's32[2]{0}', space=sflag, size = 0x8, scoped, tag = 'scoped memory for tpu_custom_call.1']
    #allocation7 [shape = 'u8[24576]{0}', space=vmem, size = 0x6000, scoped, tag = 'output window, operand 0']
    %10 = vsyncpa [#allocation5], 0
    %11 = vsyncpa [#allocation6], 0
    %s12 = scalar_lea.sflag [#allocation6], 1
    %13 = vsyncpa %s12, 0
    loop: start=0, step=1, limit=4
    $region2: #{tpu_custom_call.1} parent=1 // loop_pre_header
      _
    $region3: #{tpu_custom_call.1} parent=1 // loop_header
      %s15 = sphi 0, %s19
      %p16 = scmp.ge.s32.totalorder %s15, 4
      %s25 = sphi 0, %s27
      %s28 = sphi 0, %s25
      %s29 = sphi 0, %s28
      %s45 = sphi 0, %s29
      %s49 = sphi 0, %s49
      %s51 = sphi 0, %s49
      %s52 = sphi 0, %s51
      %s66 = sphi 0, %s52
      %s70 = sphi 0, %s70
      %s72 = sphi 0, %s70
      %s73 = sphi 0, %s72
      %s87 = sphi 0, %s73
      %s91 = sphi 0, %s91
      %s93 = sphi 0, %s91
      %s94 = sphi 0, %s93
      %s108 = sphi 0, %s94
      %s114 = sphi 0, %s116
      %s117 = sphi 0, %s114
      %s118 = sphi 0, %s117
      %s134 = sphi 0, %s118
    $region4: #{tpu_custom_call.1} parent=1 // loop_header_branch
      %18 = sbr.rel (%p16) target = $region8
    $region5: #{tpu_custom_call.1} parent=1 // loop_body
      %s20 = ssub.s32 %s15, 1
      %s21 = ssub.s32 %s15, 2
      %s22 = sadd.s32 %s15, 1
      %s23 = ssub.s32 %s15, %s22
      %p24 = scmp.eq.s32.totalorder %s23, 0
      %s26 = sadd.s32 %s25, 1
      %s27 = scalar_select %p24, %s25, %s26
      %p30 = pneg %p24
      %p31 = scmp.eq.s32.totalorder %s15, 1
      %p32 = por %p30, %p31
      %p33 = scmp.ne.s32.totalorder %s25, %s28
      %p34 = scmp.eq.s32.totalorder %s15, 0
      %p35 = por %p33, %p34
      %p36 = scmp.ne.s32.totalorder %s25, %s28
      %p37 = scmp.eq.s32.totalorder %s20, 1
      %p38 = por %p36, %p37
      %p39 = scmp.ne.s32.totalorder %s28, %s29
      %p40 = scmp.eq.s32.totalorder %s20, 0
      %p41 = por %p39, %p40
      %p42 = scmp.ne.s32.totalorder %s28, %s29
      %p43 = scmp.eq.s32.totalorder %s21, 1
      %p44 = por %p42, %p43
      %p46 = scmp.ne.s32.totalorder %s29, %s45
      %p47 = scmp.eq.s32.totalorder %s21, 0
      %p48 = por %p46, %p47
      %s50 = sadd.s32 %s49, 1
      %p53 = scmp.eq.s32.totalorder %s15, 1
      %p54 = scmp.ne.s32.totalorder %s49, %s51
      %p55 = scmp.eq.s32.totalorder %s15, 0
      %p56 = por %p54, %p55
      %p57 = scmp.ne.s32.totalorder %s49, %s51
      %p58 = scmp.eq.s32.totalorder %s20, 1
      %p59 = por %p57, %p58
      %p60 = scmp.ne.s32.totalorder %s51, %s52
      %p61 = scmp.eq.s32.totalorder %s20, 0
      %p62 = por %p60, %p61
      %p63 = scmp.ne.s32.totalorder %s51, %s52
      %p64 = scmp.eq.s32.totalorder %s21, 1
      %p65 = por %p63, %p64
      %p67 = scmp.ne.s32.totalorder %s52, %s66
      %p68 = scmp.eq.s32.totalorder %s21, 0
      %p69 = por %p67, %p68
      %s71 = sadd.s32 %s70, 1
      %p74 = scmp.eq.s32.totalorder %s15, 1
      %p75 = scmp.ne.s32.totalorder %s70, %s72
      %p76 = scmp.eq.s32.totalorder %s15, 0
      %p77 = por %p75, %p76
      %p78 = scmp.ne.s32.totalorder %s70, %s72
      %p79 = scmp.eq.s32.totalorder %s20, 1
      %p80 = por %p78, %p79
      %p81 = scmp.ne.s32.totalorder %s72, %s73
      %p82 = scmp.eq.s32.totalorder %s20, 0
      %p83 = por %p81, %p82
      %p84 = scmp.ne.s32.totalorder %s72, %s73
      %p85 = scmp.eq.s32.totalorder %s21, 1
      %p86 = por %p84, %p85
      %p88 = scmp.ne.s32.totalorder %s73, %s87
      %p89 = scmp.eq.s32.totalorder %s21, 0
      %p90 = por %p88, %p89
      %s92 = sadd.s32 %s91, 1
      %p95 = scmp.eq.s32.totalorder %s15, 1
      %p96 = scmp.ne.s32.totalorder %s91, %s93
      %p97 = scmp.eq.s32.totalorder %s15, 0
      %p98 = por %p96, %p97
      %p99 = scmp.ne.s32.totalorder %s91, %s93
      %p100 = scmp.eq.s32.totalorder %s20, 1
      %p101 = por %p99, %p100
      %p102 = scmp.ne.s32.totalorder %s93, %s94
      %p103 = scmp.eq.s32.totalorder %s20, 0
      %p104 = por %p102, %p103
      %p105 = scmp.ne.s32.totalorder %s93, %s94
      %p106 = scmp.eq.s32.totalorder %s21, 1
      %p107 = por %p105, %p106
      %p109 = scmp.ne.s32.totalorder %s94, %s108
      %p110 = scmp.eq.s32.totalorder %s21, 0
      %p111 = por %p109, %p110
      %s112 = ssub.s32 %s15, %s22
      %p113 = scmp.eq.s32.totalorder %s112, 0
      %s115 = sadd.s32 %s114, 1
      %s116 = scalar_select %p113, %s114, %s115
      %p119 = pneg %p113
      %p120 = scmp.eq.s32.totalorder %s15, 1
      %p121 = por %p119, %p120
      %p122 = scmp.ne.s32.totalorder %s114, %s117
      %p123 = scmp.eq.s32.totalorder %s15, 0
      %p124 = por %p122, %p123
      %p125 = scmp.ne.s32.totalorder %s114, %s117
      %p126 = scmp.eq.s32.totalorder %s20, 1
      %p127 = por %p125, %p126
      %p128 = scmp.ne.s32.totalorder %s117, %s118
      %p129 = scmp.eq.s32.totalorder %s20, 0
      %p130 = por %p128, %p129
      %p131 = scmp.ne.s32.totalorder %s117, %s118
      %p132 = scmp.eq.s32.totalorder %s21, 1
      %p133 = por %p131, %p132
      %p135 = scmp.ne.s32.totalorder %s118, %s134
      %p136 = scmp.eq.s32.totalorder %s21, 0
      %p137 = por %p135, %p136
      %p138 = scmp.le.s32.totalorder 1, %s15
      %p139 = scmp.lt.s32.totalorder %s15, 3
      %p140 = pnand %p138, %p139
      %p141 = pneg %p140
      // Predicated region
      $region9: #{tpu_custom_call.1} parent=5 // pred_check
        _
      $region10: #{tpu_custom_call.1} parent=5 // pred_check_branch
        %143 = sbr.rel (%p140) target = $region12
      $region11: #{tpu_custom_call.1} parent=5 // pred_region
        %s144 = ssub.s32 %s15, 1
        // Predicated region
        $region13: #{tpu_custom_call.1} parent=11 // pred_check
          %p145 = pneg %p62
        $region14: #{tpu_custom_call.1} parent=11 // pred_check_branch
          %147 = sbr.rel (%p145) target = $region16
        $region15: #{tpu_custom_call.1} parent=11 // pred_region
          %s149 = ssub.s32 128, 128
          %150 = vsyncadd [#allocation5], %s149
          %s152 = sshll.u32 [#allocation4], 4
          %s153 = int_to_ptr.vmem [resolvable:$true] %s152
          %155 = dma.hbm_to_vmem [thread:$0]  %s1, 128, %s153, [#allocation5]
        $region16: #{tpu_custom_call.1} parent=11 // pred_fallthru
          _
        // Predicated region
        $region17: #{tpu_custom_call.1} parent=11 // pred_check
          %p156 = pneg %p83
        $region18: #{tpu_custom_call.1} parent=11 // pred_check_branch
          %158 = sbr.rel (%p156) target = $region20
        $region19: #{tpu_custom_call.1} parent=11 // pred_region
          _
        $region20: #{tpu_custom_call.1} parent=11 // pred_fallthru
          _
        // Predicated region
        $region21: #{tpu_custom_call.1} parent=11 // pred_check
          %p159 = pneg %p104
        $region22: #{tpu_custom_call.1} parent=11 // pred_check_branch
          %161 = sbr.rel (%p159) target = $region24
        $region23: #{tpu_custom_call.1} parent=11 // pred_region
          _
        $region24: #{tpu_custom_call.1} parent=11 // pred_fallthru
          _
      $region12: #{tpu_custom_call.1} parent=5 // pred_fallthru
        _
      %p162 = scmp.lt.s32.totalorder %s15, 2
      // Predicated region
      $region25: #{tpu_custom_call.1} parent=5 // pred_check
        %p163 = pneg %p162
      $region26: #{tpu_custom_call.1} parent=5 // pred_check_branch
        %165 = sbr.rel (%p163) target = $region28
      $region27: #{tpu_custom_call.1} parent=5 // pred_region
        // Predicated region
        $region29: #{tpu_custom_call.1} parent=27 // pred_check
          %p166 = pneg %p35
        $region30: #{tpu_custom_call.1} parent=27 // pred_check_branch
          %168 = sbr.rel (%p166) target = $region32
        $region31: #{tpu_custom_call.1} parent=27 // pred_region
          %p169 = scmp.lt.s32.totalorder %s15, 1
          %s170 = scalar_select %p169, %s15, 1
          %s171 = smul.addr %s170, 3
          %s172 = smul.addr %s171, 2
          %s173 = scalar_lea.vmem %s0, %s172
        $region32: #{tpu_custom_call.1} parent=27 // pred_fallthru
          _
      $region28: #{tpu_custom_call.1} parent=5 // pred_fallthru
        _
      %p174 = scmp.le.s32.totalorder 1, %s15
      %p175 = scmp.lt.s32.totalorder %s15, 3
      %p176 = pnand %p174, %p175
      %p177 = pneg %p176
      // Predicated region
      $region33: #{tpu_custom_call.1} parent=5 // pred_check
        _
      $region34: #{tpu_custom_call.1} parent=5 // pred_check_branch
        %179 = sbr.rel (%p176) target = $region36
      $region35: #{tpu_custom_call.1} parent=5 // pred_region
        %s180 = ssub.s32 %s15, 1
        // Predicated region
        $region37: #{tpu_custom_call.1} parent=35 // pred_check
          %p181 = pneg %p62
        $region38: #{tpu_custom_call.1} parent=35 // pred_check_branch
          %183 = sbr.rel (%p181) target = $region40
        $region39: #{tpu_custom_call.1} parent=35 // pred_region
          %184 = dma.done [#allocation5], 128
        $region40: #{tpu_custom_call.1} parent=35 // pred_fallthru
          _
        %p185 = scmp.lt.s32.totalorder %s20, 1
        %s186 = scalar_select %p185, %s20, 1
        %s187 = smul.addr %s186, 3
        %s188 = smul.addr %s187, 2
        %s189 = scalar_lea.vmem %s0, %s188
        %p190 = pneg %p41
        %p191 = pneg %p38
        %p192 = pneg %p62
        %p193 = pneg %p59
        %p194 = pneg %p83
        %p195 = pneg %p80
        %p196 = pneg %p104
        %p197 = pneg %p101
        %p198 = pneg %p130
        %p199 = pneg %p127
        %s200 = sand.u32 %s117, 1
        %s201 = scalar_lea.sflag [#allocation6], %s200
        %s202 = sand.u32 %s117, 1
        %s203 = smul.addr %s202, 24
        %s204 = scalar_lea.vmem [#allocation7], %s203
        %p205 = scmp.lt.s32.totalorder %s20, 1
        %s206 = scalar_select %p205, %s20, 1
        %s207 = smul.addr %s206, 3
        %s208 = smul.addr %s207, 2
        %s209 = scalar_lea.vmem %s0, %s208
        %211 = vst [vmem:[#allocation2] sm:$0xff] 0
        %212 = vst [vmem:[#allocation2 + $0x8] sm:$0xff] 0
        %vm213 = vcmask 261120
        %214 = vst.msk [vmem:[#allocation2 + $0x10] sm:$0xff] %vm213, 0
        %215 = vst [vmem:[#allocation2 + $0x18] sm:$0xff] 0
        %216 = vst [vmem:[#allocation2 + $0x20] sm:$0xff] 0
        %217 = vst.msk [vmem:[#allocation2 + $0x28] sm:$0xff] %vm213, 0
        %218 = vst [vmem:[#allocation2 + $0x30] sm:$0xff] 0
        %219 = vst [vmem:[#allocation2 + $0x38] sm:$0xff] 0
        %220 = vst.msk [vmem:[#allocation2 + $0x40] sm:$0xff] %vm213, 0
        %221 = vst [vmem:[#allocation2 + $0x48] sm:$0xff] 0
        %222 = vst [vmem:[#allocation2 + $0x50] sm:$0xff] 0
        %223 = vst.msk [vmem:[#allocation2 + $0x58] sm:$0xff] %vm213, 0
        %224 = vst [vmem:[#allocation2 + $0x60] sm:$0xff] 0
        %225 = vst [vmem:[#allocation2 + $0x68] sm:$0xff] 0
        %226 = vst.msk [vmem:[#allocation2 + $0x70] sm:$0xff] %vm213, 0
        %227 = vst [vmem:[#allocation2 + $0x78] sm:$0xff] 0
        %228 = vst [vmem:[#allocation2 + $0x80] sm:$0xff] 0
        %229 = vst.msk [vmem:[#allocation2 + $0x88] sm:$0xff] %vm213, 0
        %230 = vst [vmem:[#allocation2 + $0x90] sm:$0xff] 0
        %231 = vst [vmem:[#allocation2 + $0x98] sm:$0xff] 0
        %232 = vst.msk [vmem:[#allocation2 + $0xa0] sm:$0xff] %vm213, 0
        %233 = vst [vmem:[#allocation2 + $0xa8] sm:$0xff] 0
        %234 = vst [vmem:[#allocation2 + $0xb0] sm:$0xff] 0
        %235 = vst.msk [vmem:[#allocation2 + $0xb8] sm:$0xff] %vm213, 0
        %236 = vst [vmem:[#allocation2 + $0xc0] sm:$0xff] 0
        %237 = vst [vmem:[#allocation2 + $0xc8] sm:$0xff] 0
        %238 = vst.msk [vmem:[#allocation2 + $0xd0] sm:$0xff] %vm213, 0
        %v239 = vld [vmem:[%s209] sm:$0x3f]
        %v241 = vcombine.high %v239, %v239
        %v243 = vunpack.c.l.s4 1983009808
        %v244 = vunpack.c.0.s8 %v243
        %v245 = vlaneseq
        %v246 = vshrl.u32 %v245, 7
        %v247 = vsub.s32 %v244, %v246
        %v248 = vrot.slane %v239, %v247
        %v250 = vunpack.c.l.s4 1983009808
        %v251 = vunpack.c.0.s8 %v250
        %v252 = vlaneseq
        %v253 = vshrl.u32 %v252, 7
        %v254 = vsub.s32 %v251, %v253
        %v255 = vrot.slane %v241, %v254
        %v256 = vcombine.high %v248, %v248
        %260 = vst [vmem:[#allocation2] sm:$0x3] %v248
        %261 = vst [vmem:[#allocation2 + $0x8] sm:$0x3] %v256
        %vm262 = vcmask 254976
        %263 = vst.msk [vmem:[#allocation2 + $0x10] sm:$0x3] %vm262, %v255
        %v264 = vld [vmem:[%s209] sm:$0x3f]
        %v266 = vcombine.high %v264, %v264
        %v268 = vunpack.c.l.s4 1983009808
        %v269 = vunpack.c.0.s8 %v268
        %v270 = vlaneseq
        %v271 = vshrl.u32 %v270, 7
        %v272 = vsub.s32 %v269, %v271
        %v273 = vrot.slane %v264, %v272
        %v275 = vunpack.c.l.s4 1983009808
        %v276 = vunpack.c.0.s8 %v275
        %v277 = vlaneseq
        %v278 = vshrl.u32 %v277, 7
        %v279 = vsub.s32 %v276, %v278
        %v280 = vrot.slane %v266, %v279
        %v281 = vcombine.high %v273, %v273
        %282 = vrot.lane.b32.xlu0 %v273, 127
        %v283 = vpop.permute.xlu0 %282
        %284 = vrot.lane.b32.xlu0 %v281, 127
        %v285 = vpop.permute.xlu0 %284
        %286 = vrot.lane.b32.xlu0 %v280, 127
        %v287 = vpop.permute.xlu0 %286
        %vm288 = vcmask 1039360
        %v289 = vsel %vm288, %v283, %v285
        %v290 = vsel %vm288, %v285, %v287
        %294 = vst [vmem:[#allocation2 + $0x18] sm:$0x3] %v289
        %295 = vst [vmem:[#allocation2 + $0x20] sm:$0x3] %v290
        %296 = vst.msk [vmem:[#allocation2 + $0x28] sm:$0x3] %vm262, %v287
        %v297 = vld [vmem:[%s209] sm:$0x3f]
        %v299 = vcombine.high %v297, %v297
        %v301 = vunpack.c.l.s4 1983009808
        %v302 = vunpack.c.0.s8 %v301
        %v303 = vlaneseq
        %v304 = vshrl.u32 %v303, 7
        %v305 = vsub.s32 %v302, %v304
        %v306 = vrot.slane %v297, %v305
        %v308 = vunpack.c.l.s4 1983009808
        %v309 = vunpack.c.0.s8 %v308
        %v310 = vlaneseq
        %v311 = vshrl.u32 %v310, 7
        %v312 = vsub.s32 %v309, %v311
        %v313 = vrot.slane %v299, %v312
        %v314 = vcombine.high %v306, %v306
        %315 = vrot.lane.b32.xlu0 %v306, 126
        %v316 = vpop.permute.xlu0 %315
        %317 = vrot.lane.b32.xlu0 %v314, 126
        %v318 = vpop.permute.xlu0 %317
        %319 = vrot.lane.b32.xlu0 %v313, 126
        %v320 = vpop.permute.xlu0 %319
        %vm321 = vcmask 1031168
        %v322 = vsel %vm321, %v316, %v318
        %v323 = vsel %vm321, %v318, %v320
        %327 = vst [vmem:[#allocation2 + $0x30] sm:$0x3] %v322
        %328 = vst [vmem:[#allocation2 + $0x38] sm:$0x3] %v323
        %329 = vst.msk [vmem:[#allocation2 + $0x40] sm:$0x3] %vm262, %v320
        %v330 = vld [vmem:[%s209] sm:$0x3f]
        %v332 = vcombine.high %v330, %v330
        %v334 = vunpack.c.l.s4 1983009808
        %v335 = vunpack.c.0.s8 %v334
        %v336 = vlaneseq
        %v337 = vshrl.u32 %v336, 7
        %v338 = vsub.s32 %v335, %v337
        %v339 = vrot.slane %v330, %v338
        %v341 = vunpack.c.l.s4 1983009808
        %v342 = vunpack.c.0.s8 %v341
        %v343 = vlaneseq
        %v344 = vshrl.u32 %v343, 7
        %v345 = vsub.s32 %v342, %v344
        %v346 = vrot.slane %v332, %v345
        %v347 = vcombine.high %v339, %v339
        %348 = vrot.lane.b32.xlu0 %v339, 110
        %v349 = vpop.permute.xlu0 %348
        %350 = vrot.lane.b32.xlu0 %v347, 110
        %v351 = vpop.permute.xlu0 %350
        %352 = vrot.lane.b32.xlu0 %v346, 110
        %v353 = vpop.permute.xlu0 %352
        %vm354 = vcmask 900096
        %v355 = vsel %vm354, %v349, %v351
        %v356 = vsel %vm354, %v351, %v353
        %360 = vst [vmem:[#allocation2 + $0x48] sm:$0x3] %v355
        %361 = vst [vmem:[#allocation2 + $0x50] sm:$0x3] %v356
        %362 = vst.msk [vmem:[#allocation2 + $0x58] sm:$0x3] %vm262, %v353
        %v363 = vld [vmem:[%s209] sm:$0x3f]
        %v365 = vcombine.high %v363, %v363
        %v367 = vunpack.c.l.s4 1983009808
        %v368 = vunpack.c.0.s8 %v367
        %v369 = vlaneseq
        %v370 = vshrl.u32 %v369, 7
        %v371 = vsub.s32 %v368, %v370
        %v372 = vrot.slane %v363, %v371
        %v374 = vunpack.c.l.s4 1983009808
        %v375 = vunpack.c.0.s8 %v374
        %v376 = vlaneseq
        %v377 = vshrl.u32 %v376, 7
        %v378 = vsub.s32 %v375, %v377
        %v379 = vrot.slane %v365, %v378
        %v380 = vcombine.high %v372, %v372
        %381 = vrot.lane.b32.xlu0 %v372, 109
        %v382 = vpop.permute.xlu0 %381
        %383 = vrot.lane.b32.xlu0 %v380, 109
        %v384 = vpop.permute.xlu0 %383
        %385 = vrot.lane.b32.xlu0 %v379, 109
        %v386 = vpop.permute.xlu0 %385
        %vm387 = vcmask 891904
        %v388 = vsel %vm387, %v382, %v384
        %v389 = vsel %vm387, %v384, %v386
        %393 = vst [vmem:[#allocation2 + $0x60] sm:$0x3] %v388
        %394 = vst [vmem:[#allocation2 + $0x68] sm:$0x3] %v389
        %395 = vst.msk [vmem:[#allocation2 + $0x70] sm:$0x3] %vm262, %v386
        %v396 = vld [vmem:[%s209] sm:$0x3f]
        %v398 = vcombine.high %v396, %v396
        %v400 = vunpack.c.l.s4 1983009808
        %v401 = vunpack.c.0.s8 %v400
        %v402 = vlaneseq
        %v403 = vshrl.u32 %v402, 7
        %v404 = vsub.s32 %v401, %v403
        %v405 = vrot.slane %v396, %v404
        %v407 = vunpack.c.l.s4 1983009808
        %v408 = vunpack.c.0.s8 %v407
        %v409 = vlaneseq
        %v410 = vshrl.u32 %v409, 7
        %v411 = vsub.s32 %v408, %v410
        %v412 = vrot.slane %v398, %v411
        %v413 = vcombine.high %v405, %v405
        %414 = vrot.lane.b32.xlu0 %v405, 108
        %v415 = vpop.permute.xlu0 %414
        %416 = vrot.lane.b32.xlu0 %v413, 108
        %v417 = vpop.permute.xlu0 %416
        %418 = vrot.lane.b32.xlu0 %v412, 108
        %v419 = vpop.permute.xlu0 %418
        %vm420 = vcmask 883712
        %v421 = vsel %vm420, %v415, %v417
        %v422 = vsel %vm420, %v417, %v419
        %426 = vst [vmem:[#allocation2 + $0x78] sm:$0x3] %v421
        %427 = vst [vmem:[#allocation2 + $0x80] sm:$0x3] %v422
        %428 = vst.msk [vmem:[#allocation2 + $0x88] sm:$0x3] %vm262, %v419
        %v429 = vld [vmem:[%s209] sm:$0x3f]
        %v431 = vcombine.high %v429, %v429
        %v433 = vunpack.c.l.s4 1983009808
        %v434 = vunpack.c.0.s8 %v433
        %v435 = vlaneseq
        %v436 = vshrl.u32 %v435, 7
        %v437 = vsub.s32 %v434, %v436
        %v438 = vrot.slane %v429, %v437
        %v440 = vunpack.c.l.s4 1983009808
        %v441 = vunpack.c.0.s8 %v440
        %v442 = vlaneseq
        %v443 = vshrl.u32 %v442, 7
        %v444 = vsub.s32 %v441, %v443
        %v445 = vrot.slane %v431, %v444
        %v446 = vcombine.high %v438, %v438
        %447 = vrot.lane.b32.xlu0 %v438, 92
        %v448 = vpop.permute.xlu0 %447
        %449 = vrot.lane.b32.xlu0 %v446, 92
        %v450 = vpop.permute.xlu0 %449
        %451 = vrot.lane.b32.xlu0 %v445, 92
        %v452 = vpop.permute.xlu0 %451
        %vm453 = vcmask 752640
        %v454 = vsel %vm453, %v448, %v450
        %v455 = vsel %vm453, %v450, %v452
        %459 = vst [vmem:[#allocation2 + $0x90] sm:$0x3] %v454
        %460 = vst [vmem:[#allocation2 + $0x98] sm:$0x3] %v455
        %461 = vst.msk [vmem:[#allocation2 + $0xa0] sm:$0x3] %vm262, %v452
        %v462 = vld [vmem:[%s209] sm:$0x3f]
        %v464 = vcombine.high %v462, %v462
        %v466 = vunpack.c.l.s4 1983009808
        %v467 = vunpack.c.0.s8 %v466
        %v468 = vlaneseq
        %v469 = vshrl.u32 %v468, 7
        %v470 = vsub.s32 %v467, %v469
        %v471 = vrot.slane %v462, %v470
        %v473 = vunpack.c.l.s4 1983009808
        %v474 = vunpack.c.0.s8 %v473
        %v475 = vlaneseq
        %v476 = vshrl.u32 %v475, 7
        %v477 = vsub.s32 %v474, %v476
        %v478 = vrot.slane %v464, %v477
        %v479 = vcombine.high %v471, %v471
        %480 = vrot.lane.b32.xlu0 %v471, 91
        %v481 = vpop.permute.xlu0 %480
        %482 = vrot.lane.b32.xlu0 %v479, 91
        %v483 = vpop.permute.xlu0 %482
        %484 = vrot.lane.b32.xlu0 %v478, 91
        %v485 = vpop.permute.xlu0 %484
        %vm486 = vcmask 744448
        %v487 = vsel %vm486, %v481, %v483
        %v488 = vsel %vm486, %v483, %v485
        %492 = vst [vmem:[#allocation2 + $0xa8] sm:$0x3] %v487
        %493 = vst [vmem:[#allocation2 + $0xb0] sm:$0x3] %v488
        %494 = vst.msk [vmem:[#allocation2 + $0xb8] sm:$0x3] %vm262, %v485
        %v495 = vld [vmem:[%s209] sm:$0x3f]
        %v497 = vcombine.high %v495, %v495
        %v499 = vunpack.c.l.s4 1983009808
        %v500 = vunpack.c.0.s8 %v499
        %v501 = vlaneseq
        %v502 = vshrl.u32 %v501, 7
        %v503 = vsub.s32 %v500, %v502
        %v504 = vrot.slane %v495, %v503
        %v506 = vunpack.c.l.s4 1983009808
        %v507 = vunpack.c.0.s8 %v506
        %v508 = vlaneseq
        %v509 = vshrl.u32 %v508, 7
        %v510 = vsub.s32 %v507, %v509
        %v511 = vrot.slane %v497, %v510
        %v512 = vcombine.high %v504, %v504
        %513 = vrot.lane.b32.xlu0 %v504, 90
        %v514 = vpop.permute.xlu0 %513
        %515 = vrot.lane.b32.xlu0 %v512, 90
        %v516 = vpop.permute.xlu0 %515
        %517 = vrot.lane.b32.xlu0 %v511, 90
        %v518 = vpop.permute.xlu0 %517
        %vm519 = vcmask 736256
        %v520 = vsel %vm519, %v514, %v516
        %v521 = vsel %vm519, %v516, %v518
        %525 = vst [vmem:[#allocation2 + $0xc0] sm:$0x3] %v520
        %526 = vst [vmem:[#allocation2 + $0xc8] sm:$0x3] %v521
        %527 = vst.msk [vmem:[#allocation2 + $0xd0] sm:$0x3] %vm262, %v518
        %v528 = vld [vmem:[#allocation4] sm:$0xff]
        %v529 = vld [vmem:[#allocation2] sm:$0xff]
        %v530 = vld [vmem:[#allocation2 + $0x8] sm:$0xff]
        %v531 = vld [vmem:[#allocation2 + $0x10] sm:$0xff]
        %v532 = vld [vmem:[#allocation2 + $0x18] sm:$0xff]
        %v533 = vld [vmem:[#allocation2 + $0x20] sm:$0xff]
        %v534 = vld [vmem:[#allocation2 + $0x28] sm:$0xff]
        %v535 = vld [vmem:[#allocation2 + $0x30] sm:$0xff]
        %v536 = vld [vmem:[#allocation2 + $0x38] sm:$0xff]
        %v537 = vld [vmem:[#allocation2 + $0x40] sm:$0xff]
        %v538 = vld [vmem:[#allocation2 + $0x48] sm:$0xff]
        %v539 = vld [vmem:[#allocation2 + $0x50] sm:$0xff]
        %v540 = vld [vmem:[#allocation2 + $0x58] sm:$0xff]
        %v541 = vld [vmem:[#allocation2 + $0x60] sm:$0xff]
        %v542 = vld [vmem:[#allocation2 + $0x68] sm:$0xff]
        %v543 = vld [vmem:[#allocation2 + $0x70] sm:$0xff]
        %v544 = vld [vmem:[#allocation2 + $0x78] sm:$0xff]
        %v545 = vld [vmem:[#allocation2 + $0x80] sm:$0xff]
        %v546 = vld [vmem:[#allocation2 + $0x88] sm:$0xff]
        %v547 = vld [vmem:[#allocation2 + $0x90] sm:$0xff]
        %v548 = vld [vmem:[#allocation2 + $0x98] sm:$0xff]
        %v549 = vld [vmem:[#allocation2 + $0xa0] sm:$0xff]
        %v550 = vld [vmem:[#allocation2 + $0xa8] sm:$0xff]
        %v551 = vld [vmem:[#allocation2 + $0xb0] sm:$0xff]
        %v552 = vld [vmem:[#allocation2 + $0xb8] sm:$0xff]
        %v553 = vld [vmem:[#allocation2 + $0xc0] sm:$0xff]
        %v554 = vld [vmem:[#allocation2 + $0xc8] sm:$0xff]
        %v555 = vld [vmem:[#allocation2 + $0xd0] sm:$0xff]
        %v556 = vld [vmem:[%s2] sm:$0xff]
        %558 = vset.pattern.permute.xlu0 0
        %559 = vperm.xlu0 %558, %v556
        %v560 = vpop.permute.xlu0 %559
        %v563 = vunpack.c.l.b16 %v528
        %v564 = vunpack.c.h.b16 %v528
        %v565 = vpack.c.b16 %v563, %v563
        %v566 = vpack.c.b16 %v564, %v564
        %vm568 = vcmask 130048
        %v570 = vsel %vm568, %v566, 0
        %572 = vmatprep.subr.bf16.mxu0 %v530
        %573 = vmatpush1.bf16.msra.mxu0 %v529
        %574 = vmatprep.subr.bf16.mxu0 %v533
        %575 = vmatpush1.bf16.msra.mxu0 %v532
        %576 = vmatprep.subr.bf16.mxu0 %v536
        %577 = vmatpush1.bf16.msra.mxu0 %v535
        %578 = vmatprep.subr.bf16.mxu0 %v539
        %579 = vmatpush1.bf16.msra.mxu0 %v538
        %580 = vmatprep.subr.bf16.mxu0 %v542
        %581 = vmatpush1.bf16.msra.mxu0 %v541
        %582 = vmatprep.subr.bf16.mxu0 %v545
        %583 = vmatpush1.bf16.msra.mxu0 %v544
        %584 = vmatprep.subr.bf16.mxu0 %v548
        %585 = vmatpush1.bf16.msra.mxu0 %v547
        %586 = vmatprep.subr.bf16.mxu0 %v551
        %587 = vmatpush1.bf16.msra.mxu0 %v550
        %588 = vmatprep.subr.bf16.mxu0 %v554
        %589 = vmatpush1.bf16.msra.mxu0 %v553
        %590 = vmatprep.subr.bf16.mxu0 0
        %591 = vmatpush1.bf16.msra.mxu0 0
        %592 = vmatprep.subr.bf16.mxu0 0
        %593 = vmatpush1.bf16.msra.mxu0 0
        %594 = vmatprep.subr.bf16.mxu0 0
        %595 = vmatpush1.bf16.msra.mxu0 0
        %596 = vmatprep.subr.bf16.mxu0 0
        %597 = vmatpush1.bf16.msra.mxu0 0
        %598 = vmatprep.subr.bf16.mxu0 0
        %599 = vmatpush1.bf16.msra.mxu0 0
        %600 = vmatprep.subr.bf16.mxu0 0
        %601 = vmatpush1.bf16.msra.mxu0 0
        %602 = vmatprep.subr.bf16.mxu0 0
        %603 = vmatpush1.bf16.msra.mxu0 0
        %604 = vmatprep.mubr.bf16.mxu0 %v570
        %605 = vmatmul.mubr.bf16.gmra.mrb[0].mxu0 %v565
        %v606 = vpop.f32.mrb[0].mxu0
        %v607 = vadd.f32 %v560, %v606
        %v608 = vpop.f32.mrb[0].mxu0
        %v609 = vadd.f32 %v560, %v608
        %v610 = vpop.f32.mrb[0].mxu0
        %v611 = vpop.f32.mrb[0].mxu0
        %612 = vdwg.mxu0
        %613 = vmatprep.subr.bf16.mxu0 0
        %614 = vmatpush1.bf16.msra.mxu0 %v531
        %615 = vmatprep.subr.bf16.mxu0 0
        %616 = vmatpush1.bf16.msra.mxu0 %v534
        %617 = vmatprep.subr.bf16.mxu0 0
        %618 = vmatpush1.bf16.msra.mxu0 %v537
        %619 = vmatprep.subr.bf16.mxu0 0
        %620 = vmatpush1.bf16.msra.mxu0 %v540
        %621 = vmatprep.subr.bf16.mxu0 0
        %622 = vmatpush1.bf16.msra.mxu0 %v543
        %623 = vmatprep.subr.bf16.mxu0 0
        %624 = vmatpush1.bf16.msra.mxu0 %v546
        %625 = vmatprep.subr.bf16.mxu0 0
        %626 = vmatpush1.bf16.msra.mxu0 %v549
        %627 = vmatprep.subr.bf16.mxu0 0
        %628 = vmatpush1.bf16.msra.mxu0 %v552
        %629 = vmatprep.subr.bf16.mxu0 0
        %630 = vmatpush1.bf16.msra.mxu0 %v555
        %631 = vmatprep.subr.bf16.mxu0 0
        %632 = vmatpush1.bf16.msra.mxu0 0
        %633 = vmatprep.subr.bf16.mxu0 0
        %634 = vmatpush1.bf16.msra.mxu0 0
        %635 = vmatprep.subr.bf16.mxu0 0
        %636 = vmatpush1.bf16.msra.mxu0 0
        %637 = vmatprep.subr.bf16.mxu0 0
        %638 = vmatpush1.bf16.msra.mxu0 0
        %639 = vmatprep.subr.bf16.mxu0 0
        %640 = vmatpush1.bf16.msra.mxu0 0
        %641 = vmatprep.subr.bf16.mxu0 0
        %642 = vmatpush1.bf16.msra.mxu0 0
        %643 = vmatprep.subr.bf16.mxu0 0
        %644 = vmatpush1.bf16.msra.mxu0 0
        %645 = vmatprep.mubr.bf16.mxu0 %v570
        %646 = vmatmul.mubr.bf16.gmra.mrb[0].mxu0 %v565
        %v647 = vpop.f32.mrb[0].mxu0
        %v648 = vadd.f32 %v560, %v647
        %v649 = vpop.f32.mrb[0].mxu0
        %v650 = vpop.f32.mrb[0].mxu0
        %v651 = vpop.f32.mrb[0].mxu0
        %652 = vdwg.mxu0
        %s653 = sld [smem:[#allocation3]]
        %vm654 = vcmp.ge.f32.partialorder %v607, 0.0
        %vm655 = vcmp.ge.f32.partialorder %v609, 0.0
        %vm656 = vcmp.ge.f32.partialorder %v648, 0.0
        %v657 = vstv %s653
        %v658 = vmul.f32 %v657, %v607
        %v659 = vmul.f32 %v657, %v609
        %v660 = vmul.f32 %v657, %v648
        %v661 = vsel %vm654, %v607, %v658
        %v662 = vsel %vm655, %v609, %v659
        %v663 = vsel %vm656, %v648, %v660
        %664 = vst [vmem:[%s204] sm:$0xff] %v661
        %665 = vst [vmem:[%s204 + $0x8] sm:$0xff] %v662
        %666 = vst.msk [vmem:[%s204 + $0x10] sm:$0xff] %vm213, %v663
        %s667 = sand.u32 %s117, 1
        %s668 = scalar_lea.sflag [#allocation6], %s667
        %s669 = sand.u32 %s117, 1
        %s670 = smul.addr %s669, 24
        %s671 = scalar_lea.vmem [#allocation7], %s670
        // Predicated region
        $region41: #{tpu_custom_call.1} parent=35 // pred_check
          %p672 = pneg %p127
        $region42: #{tpu_custom_call.1} parent=35 // pred_check_branch
          %674 = sbr.rel (%p672) target = $region44
        $region43: #{tpu_custom_call.1} parent=35 // pred_region
          %s676 = ssub.s32 384, 384
          %677 = vsyncadd %s668, %s676
          %s678 = smul.addr %s20, 3
          %s679 = smul.addr %s678, 128
          %s680 = scalar_lea.hbm %s4, %s679
          %s682 = sshll.u32 %s671, 4
          %s683 = int_to_ptr.vmem [resolvable:$true] %s682
          %685 = dma.vmem_to_hbm [thread:$0]  %s683, 384, %s680, %s668
        $region44: #{tpu_custom_call.1} parent=35 // pred_fallthru
          _
      $region36: #{tpu_custom_call.1} parent=5 // pred_fallthru
        _
      %p686 = scmp.le.s32.totalorder 2, %s15
      // Predicated region
      $region45: #{tpu_custom_call.1} parent=5 // pred_check
        %p687 = pneg %p686
      $region46: #{tpu_custom_call.1} parent=5 // pred_check_branch
        %689 = sbr.rel (%p687) target = $region48
      $region47: #{tpu_custom_call.1} parent=5 // pred_region
        %s690 = ssub.s32 %s15, 2
        // Predicated region
        $region49: #{tpu_custom_call.1} parent=47 // pred_check
          %p691 = pneg %p133
        $region50: #{tpu_custom_call.1} parent=47 // pred_check_branch
          %693 = sbr.rel (%p691) target = $region52
        $region51: #{tpu_custom_call.1} parent=47 // pred_region
          %s694 = sand.u32 %s118, 1
          %s695 = scalar_lea.sflag [#allocation6], %s694
          %s696 = sand.u32 %s118, 1
          %s697 = smul.addr %s696, 24
          %s698 = scalar_lea.vmem [#allocation7], %s697
          %699 = dma.done %s695, 384
        $region52: #{tpu_custom_call.1} parent=47 // pred_fallthru
          _
      $region48: #{tpu_custom_call.1} parent=5 // pred_fallthru
        _
    $region6: #{tpu_custom_call.1} parent=1 // loop_footer
      %s19 = sadd.s32 1, %s15
    $region7: #{tpu_custom_call.1} parent=1 // loop_footer_branch
      %14 = sbr.rel target = $region3
    $region8: #{tpu_custom_call.1} parent=1 // loop_exit
      _
    %700 = vsyncpa [#allocation5], 1
    %s701 = scalar_lea.sflag [#allocation5], 1
    %702 = vsyncpa %s701, 1
    %703 = vsyncpa [#allocation6], 1
    %s704 = scalar_lea.sflag [#allocation6], 1
    %705 = vsyncpa %s704, 1

</llo_original>
